<compile_context>
chip_gen: v6e
topology: v6e:2x2x1
jax: 0.10.0
libtpu: 0.0.40
codegen_flags: <defaults>
</compile_context>

<pallas_src>
import jax
import jax.numpy as jnp
from jax.experimental import pallas as pl
from jax.experimental.pallas import tpu as pltpu

IN_FEATURES = 54
OUT_FEATURES = 7

DEFAULT_B_TILE = 16384     # rows per grid step (multiple of 128)
MAX_B_TILE = 16384         # keep double-buffered footprint well under 64 MiB
MIN_SPLIT_ROWS = 2048      # min rows/step when splitting for 2-TC megacore
XLA_FALLBACK_BATCH = 1024  # below this, a fused XLA matmul is already optimal


def _cdiv(a, b):
    return -(-a // b)


def _round_up(v, m):
    return (v + m - 1) // m * m


def _linear_kernel(x_ref, w_ref, b_ref, ot_ref):
    # x_ref:  (tile, 54)  VMEM  (pipelined over the batch grid)
    # w_ref:  (7, 54)     VMEM  (resident across grid steps)
    # b_ref:  (7, 1)      VMEM  (resident across grid steps)
    # ot_ref: (7, tile)   VMEM  (lane-dense transposed output block)
    acc = jax.lax.dot_general(
        w_ref[...], x_ref[...],
        dimension_numbers=(((1,), (1,)), ((), ())),   # contract K=54 on both
        preferred_element_type=jnp.float32,
    )                                                  # (7, tile)
    ot_ref[...] = (acc + b_ref[...]).astype(ot_ref.dtype)


def _choose_tile(batch, b_tile):
    cap = DEFAULT_B_TILE if b_tile is None else max(int(b_tile), 128)
    cap = min(_round_up(cap, 128), MAX_B_TILE)
    if batch > cap:
        return cap                                   # multi-step grid, tile % 128 == 0
    if batch >= 2 * MIN_SPLIT_ROWS:
        # Medium batch that would collapse to one step: split so v7x's two
        # TensorCores both get a grid step (tile stays a multiple of 128).
        return _round_up(_cdiv(batch, 2), 128)
    return batch                                     # single full block (any size)


def _vmem_limit_bytes(tile):
    # x block is lane-padded 54 -> 128; transposed out block is sublane-padded
    # 7 -> 8; both double-buffered by the pipeline.
    x_buf = _round_up(tile, 8) * 128 * 4
    out_buf = 8 * _round_up(tile, 128) * 4
    need = 2 * (x_buf + out_buf) + (2 << 20)         # + weights/bias/slack
    return int(min(max(need, 32 << 20), 56 << 20))   # <= 56 MiB (< v7x physical)


def logistic_regression_cov_forward(x, weight, bias, *, b_tile=None, use_pallas=None):
    """Forward pass: x.view(B, -1) @ weight.T + bias.

    Args:
      x:      (B, ...) float array, flattened to (B, 54)
      weight: (7, 54) float32  (PyTorch nn.Linear convention: (out, in))
      bias:   (7,)    float32
      b_tile: optional cap on rows per grid step (rounded to a multiple of 128)
      use_pallas: True = force Pallas, False = force XLA, None = auto
    Returns:
      (B, 7) float32
    """
    batch = x.shape[0]
    x2d = x.reshape(batch, -1)
    assert x2d.shape[1] == IN_FEATURES, f"expected {IN_FEATURES} features"

    w = jnp.asarray(weight, jnp.float32)                       # (7, 54)
    b_col = jnp.asarray(bias, jnp.float32).reshape(OUT_FEATURES, 1)

    if use_pallas is None:
        use_pallas = batch >= XLA_FALLBACK_BATCH
    if not use_pallas:
        # Small-batch fallback: fused XLA matmul avoids Pallas fixed cost.
        return x2d.astype(jnp.float32) @ w.T + b_col.reshape(1, OUT_FEATURES)

    tile = _choose_tile(batch, b_tile)
    grid = (_cdiv(batch, tile),)                               # partial last block OK

    cost = pl.CostEstimate(
        flops=2 * batch * IN_FEATURES * OUT_FEATURES,
        bytes_accessed=batch * (IN_FEATURES + OUT_FEATURES) * 4
        + IN_FEATURES * OUT_FEATURES * 4 + OUT_FEATURES * 4,
        transcendentals=0,
    )

    out_t = pl.pallas_call(
        _linear_kernel,
        out_shape=jax.ShapeDtypeStruct((OUT_FEATURES, batch), jnp.float32),
        grid=grid,
        in_specs=[
            # x: tiled over the batch axis (software-pipelined DMAs).
            pl.BlockSpec((tile, IN_FEATURES), lambda i: (i, 0)),
            # weight / bias: constant block index -> stay resident in VMEM.
            pl.BlockSpec((OUT_FEATURES, IN_FEATURES), lambda i: (0, 0)),
            pl.BlockSpec((OUT_FEATURES, 1), lambda i: (0, 0)),
        ],
        # Lane-dense transposed output block: batch on the 128-lane axis.
        out_specs=pl.BlockSpec((OUT_FEATURES, tile), lambda i: (0, i)),
        compiler_params=pltpu.CompilerParams(
            dimension_semantics=("parallel",),
            vmem_limit_bytes=_vmem_limit_bytes(tile),
        ),
        cost_estimate=cost,
    )(x2d, w, b_col)

    return out_t.T                                             # (B, 7)


def init_params(key):
    """Deterministic init mirroring the PyTorch module.

    weight: kaiming_uniform_(fan_in=54, nonlinearity='relu')
            -> U(-bound, bound), bound = sqrt(2) * sqrt(3 / fan_in)
    bias:   PyTorch nn.Linear default -> U(-1/sqrt(fan_in), 1/sqrt(fan_in))
    """
    kw, kb = jax.random.split(key)
    fan_in = IN_FEATURES
    w_bound = jnp.sqrt(2.0) * jnp.sqrt(3.0 / fan_in)
    weight = jax.random.uniform(
        kw, (OUT_FEATURES, IN_FEATURES), jnp.float32, -w_bound, w_bound
    )
    b_bound = 1.0 / jnp.sqrt(fan_in)
    bias = jax.random.uniform(
        kb, (OUT_FEATURES,), jnp.float32, -b_bound, b_bound
    )
    return weight, bias


if __name__ == "__main__":
    key = jax.random.PRNGKey(0)
    k_params, k_x1, k_x2 = jax.random.split(key, 3)

    weight, bias = init_params(k_params)

    # Small batch: single-step Pallas path (full-extent blocks, no padding).
    batch = 8
    x = jax.random.normal(k_x1, (batch, IN_FEATURES), jnp.float32)
    out = logistic_regression_cov_forward(x, weight, bias, use_pallas=True)
    out = jax.block_until_ready(out)
    ref = x.reshape(batch, -1) @ weight.T + bias
    assert out.shape == (batch, OUT_FEATURES)
    assert jnp.allclose(out, ref, atol=1e-5, rtol=1e-5)

    # Non-divisible batch with a multi-step grid and a partial last block
    # (no wrapper-side padding).
    batch2 = 1000
    x2 = jax.random.normal(k_x2, (batch2, IN_FEATURES), jnp.float32)
    out2 = logistic_regression_cov_forward(
        x2, weight, bias, b_tile=256, use_pallas=True
    )
    out2 = jax.block_until_ready(out2)
    ref2 = x2.reshape(batch2, -1) @ weight.T + bias
    assert out2.shape == (batch2, OUT_FEATURES)
    assert jnp.allclose(out2, ref2, atol=1e-5, rtol=1e-5)

    # Auto dispatch path (small batch -> fused XLA fallback) for completeness.
    out3 = jax.block_until_ready(
        logistic_regression_cov_forward(x, weight, bias)
    )
    assert jnp.allclose(out3, ref, atol=1e-5, rtol=1e-5)

    print("KERNEL_OK")
</pallas_src>

<mosaic_0001>
module attributes {stable_mosaic.version = 11 : i64} {
  func.func @_linear_kernel(%arg0: i32, %arg1: memref<8x54xf32, #tpu.memory_space<vmem>>, %arg2: memref<7x54xf32, #tpu.memory_space<vmem>>, %arg3: memref<7x1xf32, #tpu.memory_space<vmem>>, %arg4: memref<7x8xf32, #tpu.memory_space<vmem>>) attributes {dimension_semantics = [#tpu.dimension_semantics<parallel>], iteration_bounds = array<i64: 1>, scalar_prefetch = 0 : i64, scratch_operands = 0 : i64, tpu.core_type = #tpu.core_type<tc>, window_params = [{transform_indices = @transform_0, window_bounds = array<i64: 8, 54>}, {pipeline_mode = #tpu.pipeline_mode<synchronous>, transform_indices = @transform_1, window_bounds = array<i64: 7, 54>}, {pipeline_mode = #tpu.pipeline_mode<synchronous>, transform_indices = @transform_2, window_bounds = array<i64: 7, 1>}, {transform_indices = @transform_3, window_bounds = array<i64: 7, 8>}]} {
    %c0 = arith.constant 0 : index
    %c0_0 = arith.constant 0 : index
    %0 = vector.load %arg2[%c0, %c0_0] : memref<7x54xf32, #tpu.memory_space<vmem>>, vector<7x54xf32>
    %c0_1 = arith.constant 0 : index
    %c0_2 = arith.constant 0 : index
    %1 = vector.load %arg1[%c0_1, %c0_2] : memref<8x54xf32, #tpu.memory_space<vmem>>, vector<8x54xf32>
    %cst = arith.constant dense<0.000000e+00> : vector<7x8xf32>
    %2 = tpu.matmul %0, %1, %cst {dimension_numbers = #tpu.dot_dimension_numbers<[1], [1], [0], [0], [0, 0, 1, 0], [], []>} : vector<7x54xf32>, vector<8x54xf32>, vector<7x8xf32> -> vector<7x8xf32>
    %c0_3 = arith.constant 0 : index
    %c0_4 = arith.constant 0 : index
    %3 = vector.load %arg3[%c0_3, %c0_4] : memref<7x1xf32, #tpu.memory_space<vmem>>, vector<7x1xf32>
    %4 = vector.broadcast %3 : vector<7x1xf32> to vector<7x8xf32>
    %5 = arith.addf %2, %4 : vector<7x8xf32>
    %c0_5 = arith.constant 0 : index
    %c0_6 = arith.constant 0 : index
    %6 = vector.load %arg4[%c0_5, %c0_6] : memref<7x8xf32, #tpu.memory_space<vmem>>, vector<7x8xf32>
    tpu.vector_store %arg4[%c0_5, %c0_6], %5 {strides = array<i32>} : memref<7x8xf32, #tpu.memory_space<vmem>>, vector<7x8xf32>,
    return
  }
  func.func @transform_0(%arg0: i32) -> (i32, i32) {
    %c0_i32 = arith.constant 0 : i32
    %c0_i32_0 = arith.constant 0 : i32
    return %arg0, %c0_i32 : i32, i32
  }
  func.func @transform_1(%arg0: i32) -> (i32, i32) {
    %c0_i32 = arith.constant 0 : i32
    %c0_i32_0 = arith.constant 0 : i32
    %c0_i32_1 = arith.constant 0 : i32
    return %c0_i32, %c0_i32_0 : i32, i32
  }
  func.func @transform_2(%arg0: i32) -> (i32, i32) {
    %c0_i32 = arith.constant 0 : i32
    %c0_i32_0 = arith.constant 0 : i32
    %c0_i32_1 = arith.constant 0 : i32
    return %c0_i32, %c0_i32_0 : i32, i32
  }
  func.func @transform_3(%arg0: i32) -> (i32, i32) {
    %c0_i32 = arith.constant 0 : i32
    %c0_i32_0 = arith.constant 0 : i32
    return %c0_i32, %arg0 : i32, i32
  }
}

</mosaic_0001>

<llo_original>
// kernel: tpu_custom_call.1
$region0: #{tpu_custom_call.1}
  #allocation0 [shape = 'u32[]', space=smem, size = 0x4, offset = 0x4, fixed_abs, tag = 'smem constant byte address 0x4 - core index']
  #allocation1 [shape = 'u32[144,128]{1,0:T(1,128)}', space=vmem, size = 0x12000, scoped, tag = 'internal scratch']
  %s0 = inlined_call_operand.vmem [shape: f32[8,54], index: 0, kind: input, shape index: {}]
  %s1 = inlined_call_operand.hbm [shape: f32[7,54], index: 1, kind: input, shape index: {}]
  %s2 = inlined_call_operand.vmem [shape: f32[7,1], index: 2, kind: input, shape index: {}]
  %s3 = inlined_call_operand.hbm [shape: f32[7,8], index: 3, kind: output, shape index: {}]
  %s4 = sld [smem:[#allocation0]]
  $region26: #{tpu_custom_call.1} parent=0
    _
  %s6 = ssub.s32 1, %s4
  %s7 = scalar_select 0, %s6, %s4
  $region1: #{tpu_custom_call.1} parent=0
    #allocation2 [shape = 'u8[4096]{0}', space=vmem, size = 0x1000, scoped, tag = 'input window, operand 1, single buffered']
    #allocation3 [shape = 's32[1]{0}', space=sflag, size = 0x4, scoped, tag = 'scoped memory for tpu_custom_call.1']
    #allocation4 [shape = 's32[1]{0}', space=sflag, size = 0x4, scoped, tag = 'scoped memory for tpu_custom_call.1']
    #allocation5 [shape = 'u8[4096]{0}', space=vmem, size = 0x1000, scoped, tag = 'output window, operand 0, single buffered']
    %8 = vsyncpa [#allocation3], 0
    %9 = vsyncpa [#allocation4], 0
    // Predicated region
    $region2: #{tpu_custom_call.1} parent=1 // pred_check
      _
    $region3: #{tpu_custom_call.1} parent=1 // pred_check_branch
      %11 = sbr.rel (0) target = $region5
    $region4: #{tpu_custom_call.1} parent=1 // pred_region
      _
    $region5: #{tpu_custom_call.1} parent=1 // pred_fallthru
      _
    // Predicated region
    $region6: #{tpu_custom_call.1} parent=1 // pred_check
      _
    $region7: #{tpu_custom_call.1} parent=1 // pred_check_branch
      %13 = sbr.rel (0) target = $region9
    $region8: #{tpu_custom_call.1} parent=1 // pred_region
      %s15 = ssub.s32 128, 128
      %16 = vsyncadd [#allocation3], %s15
      %s18 = sshll.u32 [#allocation2], 4
      %s19 = int_to_ptr.vmem [resolvable:$true] %s18
      %21 = dma.hbm_to_vmem [thread:$0]  %s1, 128, %s19, [#allocation3]
    $region9: #{tpu_custom_call.1} parent=1 // pred_fallthru
      _
    // Predicated region
    $region10: #{tpu_custom_call.1} parent=1 // pred_check
      _
    $region11: #{tpu_custom_call.1} parent=1 // pred_check_branch
      %23 = sbr.rel (0) target = $region13
    $region12: #{tpu_custom_call.1} parent=1 // pred_region
      _
    $region13: #{tpu_custom_call.1} parent=1 // pred_fallthru
      _
    // Predicated region
    $region14: #{tpu_custom_call.1} parent=1 // pred_check
      _
    $region15: #{tpu_custom_call.1} parent=1 // pred_check_branch
      %25 = sbr.rel (0) target = $region17
    $region16: #{tpu_custom_call.1} parent=1 // pred_region
      %26 = dma.done [#allocation3], 128
    $region17: #{tpu_custom_call.1} parent=1 // pred_fallthru
      _
    %v27 = vld [vmem:[#allocation2] sm:$0x7f]
    %v28 = vld [vmem:[%s0] sm:$0xff]
    %v29 = vld [vmem:[%s2] sm:$0x7f]
    %31 = vset.pattern.permute.xlu0 0
    %32 = vperm.xlu0 %31, %v29
    %v33 = vpop.permute.xlu0 %32
    %vm35 = vcmask 441344
    %v37 = vsel %vm35, %v27, 0
    %v40 = vsel %vm35, %v28, 0
    %42 = vmatprep.subr.mxu0 0.0
    %43 = vmatpush1.xpose.msra.mxu0 0.0
    %44 = vmatprep.subr.mxu0 0.0
    %45 = vmatpush1.xpose.msra.mxu0 0.0
    %46 = vmatprep.subr.mxu0 0.0
    %47 = vmatpush1.xpose.msra.mxu0 0.0
    %48 = vmatprep.subr.mxu0 0.0
    %49 = vmatpush1.xpose.msra.mxu0 0.0
    %50 = vmatprep.subr.mxu0 0.0
    %51 = vmatpush1.xpose.msra.mxu0 0.0
    %52 = vmatprep.subr.mxu0 0.0
    %53 = vmatpush1.xpose.msra.mxu0 0.0
    %54 = vmatprep.subr.mxu0 0.0
    %55 = vmatpush1.xpose.msra.mxu0 0.0
    %56 = vmatprep.subr.mxu0 0.0
    %57 = vmatpush1.xpose.msra.mxu0 0.0
    %58 = vmatprep.subr.mxu0 0.0
    %59 = vmatpush1.xpose.msra.mxu0 0.0
    %60 = vmatprep.subr.mxu0 0.0
    %61 = vmatpush1.xpose.msra.mxu0 0.0
    %62 = vmatprep.subr.mxu0 0.0
    %63 = vmatpush1.xpose.msra.mxu0 0.0
    %64 = vmatprep.subr.mxu0 0.0
    %65 = vmatpush1.xpose.msra.mxu0 0.0
    %66 = vmatprep.subr.mxu0 0.0
    %67 = vmatpush1.xpose.msra.mxu0 0.0
    %68 = vmatprep.subr.mxu0 0.0
    %69 = vmatpush1.xpose.msra.mxu0 0.0
    %70 = vmatprep.subr.mxu0 0.0
    %71 = vmatpush1.xpose.msra.mxu0 0.0
    %72 = vmatprep.subr.mxu0 0.0
    %73 = vmatpush1.xpose.msra.mxu0 %v40
    %74 = vmatprep.subr.mxu0 0.0
    %75 = vmatpush2.xpose.msra.mxu0 0.0
    %76 = vmatprep.subr.mxu0 0.0
    %77 = vmatpush2.xpose.msra.mxu0 0.0
    %78 = vmatprep.subr.mxu0 0.0
    %79 = vmatpush2.xpose.msra.mxu0 0.0
    %80 = vmatprep.subr.mxu0 0.0
    %81 = vmatpush2.xpose.msra.mxu0 0.0
    %82 = vmatprep.subr.mxu0 0.0
    %83 = vmatpush2.xpose.msra.mxu0 0.0
    %84 = vmatprep.subr.mxu0 0.0
    %85 = vmatpush2.xpose.msra.mxu0 0.0
    %86 = vmatprep.subr.mxu0 0.0
    %87 = vmatpush2.xpose.msra.mxu0 0.0
    %88 = vmatprep.subr.mxu0 0.0
    %89 = vmatpush2.xpose.msra.mxu0 0.0
    %90 = vmatprep.subr.mxu0 0.0
    %91 = vmatpush2.xpose.msra.mxu0 0.0
    %92 = vmatprep.subr.mxu0 0.0
    %93 = vmatpush2.xpose.msra.mxu0 0.0
    %94 = vmatprep.subr.mxu0 0.0
    %95 = vmatpush2.xpose.msra.mxu0 0.0
    %96 = vmatprep.subr.mxu0 0.0
    %97 = vmatpush2.xpose.msra.mxu0 0.0
    %98 = vmatprep.subr.mxu0 0.0
    %99 = vmatpush2.xpose.msra.mxu0 0.0
    %100 = vmatprep.subr.mxu0 0.0
    %101 = vmatpush2.xpose.msra.mxu0 0.0
    %102 = vmatprep.subr.mxu0 0.0
    %103 = vmatpush2.xpose.msra.mxu0 0.0
    %104 = vmatprep.subr.mxu0 0.0
    %105 = vmatpush2.xpose.msra.mxu0 0.0
    %106 = vmatprep.mubr.f32.mxu0 0.0
    %107 = vmatmul.mubr.f32.gmra.mxu0 %v37
    %v108 = vpop.f32.mrf.mxu0
    %v109 = vadd.f32 %v33, %v108
    %v110 = vpop.f32.mrf.mxu0
    %111 = vdwg.mxu0
    %vm112 = vcmask 63488
    %113 = vst.msk [vmem:[#allocation5] sm:$0x7f] %vm112, %v109
    // Predicated region
    $region18: #{tpu_custom_call.1} parent=1 // pred_check
      _
    $region19: #{tpu_custom_call.1} parent=1 // pred_check_branch
      %115 = sbr.rel (0) target = $region21
    $region20: #{tpu_custom_call.1} parent=1 // pred_region
      %s117 = ssub.s32 128, 128
      %118 = vsyncadd [#allocation4], %s117
      %s120 = sshll.u32 [#allocation5], 4
      %s121 = int_to_ptr.vmem [resolvable:$true] %s120
      %123 = dma.vmem_to_hbm [thread:$0]  %s121, 128, %s3, [#allocation4]
    $region21: #{tpu_custom_call.1} parent=1 // pred_fallthru
      _
    // Predicated region
    $region22: #{tpu_custom_call.1} parent=1 // pred_check
      _
    $region23: #{tpu_custom_call.1} parent=1 // pred_check_branch
      %125 = sbr.rel (0) target = $region25
    $region24: #{tpu_custom_call.1} parent=1 // pred_region
      %126 = dma.done [#allocation4], 128
    $region25: #{tpu_custom_call.1} parent=1 // pred_fallthru
      _
    %127 = vsyncpa [#allocation3], 1
    %128 = vsyncpa [#allocation4], 1

</llo_original>
